<compile_context>
chip_gen: v7x
topology: tpu7x:2x2x1
jax: 0.10.0
libtpu: 0.0.40
codegen_flags: <defaults>
</compile_context>

<pallas_src>
import functools

import jax
import jax.numpy as jnp
from jax.experimental import pallas as pl
from jax.experimental.pallas import tpu as pltpu

HIDDEN = 256
N_PAD = 128          # lane-dense padded action dimension
MAX_TB = 512         # batch tile cap (sized for v7x 32 MiB scoped VMEM)


def dqn_mlp_kernel(x_ref, w1_ref, b1_ref, w2_ref, b2_ref, w3_ref, b3_ref,
                   out_ref):
    # fc1 + ReLU (bf16 operands, f32 accumulation, f32 bias/ReLU)
    x = x_ref[...].astype(jnp.bfloat16)                               # [TB, D]
    h1 = jnp.dot(x, w1_ref[...], preferred_element_type=jnp.float32)
    h1 = jnp.maximum(h1 + b1_ref[...], 0.0)                           # [TB, 256]
    # fc2 + ReLU
    h2 = jnp.dot(h1.astype(jnp.bfloat16), w2_ref[...],
                 preferred_element_type=jnp.float32)
    h2 = jnp.maximum(h2 + b2_ref[...], 0.0)                           # [TB, 256]
    # fc3 (no activation), lane-dense padded output
    out = jnp.dot(h2.astype(jnp.bfloat16), w3_ref[...],
                  preferred_element_type=jnp.float32)
    out_ref[...] = (out + b3_ref[...]).astype(out_ref.dtype)          # [TB, 128]


def _round_up(x, m):
    return ((x + m - 1) // m) * m


@functools.partial(jax.jit, static_argnames=("n_actions",))
def dqn_forward(state, params, n_actions):
    """state: [B, input_dims] f32. params: bf16 weights [in, out] (fc3 padded
    to N_PAD columns), f32 biases [1, out]. Returns [B, n_actions] f32."""
    w1, b1 = params["fc1"]
    w2, b2 = params["fc2"]
    w3, b3 = params["fc3"]

    B, D = state.shape
    # Batch tile: multiple of 8 sublanes, capped for v7x VMEM.
    TB = min(MAX_TB, _round_up(B, 8))
    B_pad = _round_up(B, TB)
    if B_pad != B:
        state = jnp.pad(state, ((0, B_pad - B), (0, 0)))
    grid = (B_pad // TB,)

    resident = lambda i: (0, 0)   # weights/biases: same block every step

    out = pl.pallas_call(
        dqn_mlp_kernel,
        out_shape=jax.ShapeDtypeStruct((B_pad, N_PAD), jnp.float32),
        grid=grid,
        in_specs=[
            pl.BlockSpec((TB, D), lambda i: (i, 0)),          # x: batch-tiled
            pl.BlockSpec((D, HIDDEN), resident),              # w1
            pl.BlockSpec((1, HIDDEN), resident),              # b1
            pl.BlockSpec((HIDDEN, HIDDEN), resident),         # w2
            pl.BlockSpec((1, HIDDEN), resident),              # b2
            pl.BlockSpec((HIDDEN, N_PAD), resident),          # w3 (padded)
            pl.BlockSpec((1, N_PAD), resident),               # b3 (padded)
        ],
        out_specs=pl.BlockSpec((TB, N_PAD), lambda i: (i, 0)),
        compiler_params=pltpu.CompilerParams(
            dimension_semantics=("parallel",)),
    )(state, w1, b1, w2, b2, w3, b3)

    return out[:B, :n_actions]


def init_params(key, input_dims, n_actions, hidden=HIDDEN):
    """PyTorch-style uniform(+/- 1/sqrt(fan_in)) init.  Weights stored as
    [in_features, out_features] in bf16; biases in f32.  fc3 weight/bias are
    zero-padded from n_actions to N_PAD lanes."""
    def linear(key, fan_in, fan_out):
        kw, kb = jax.random.split(key)
        bound = 1.0 / jnp.sqrt(jnp.float32(fan_in))
        w = jax.random.uniform(kw, (fan_in, fan_out), jnp.float32,
                               minval=-bound, maxval=bound)
        b = jax.random.uniform(kb, (1, fan_out), jnp.float32,
                               minval=-bound, maxval=bound)
        return w.astype(jnp.bfloat16), b

    k1, k2, k3 = jax.random.split(key, 3)
    w1, b1 = linear(k1, input_dims, hidden)
    w2, b2 = linear(k2, hidden, hidden)
    w3, b3 = linear(k3, hidden, n_actions)
    # Zero-pad fc3 columns to the lane-dense width (extra columns are exact
    # zeros, sliced away by the wrapper).
    w3 = jnp.pad(w3, ((0, 0), (0, N_PAD - n_actions)))
    b3 = jnp.pad(b3, ((0, 0), (0, N_PAD - n_actions)))
    return {"fc1": (w1, b1), "fc2": (w2, b2), "fc3": (w3, b3)}


def dqn_forward_ref(state, params, n_actions):
    """Plain-JAX reference mirroring the kernel's bf16/f32 mixed precision."""
    w1, b1 = params["fc1"]
    w2, b2 = params["fc2"]
    w3, b3 = params["fc3"]
    x = state.astype(jnp.bfloat16)
    h1 = jnp.maximum(
        jnp.dot(x, w1, preferred_element_type=jnp.float32) + b1, 0.0)
    h2 = jnp.maximum(
        jnp.dot(h1.astype(jnp.bfloat16), w2,
                preferred_element_type=jnp.float32) + b2, 0.0)
    out = jnp.dot(h2.astype(jnp.bfloat16), w3,
                  preferred_element_type=jnp.float32) + b3
    return out[:, :n_actions]


if __name__ == "__main__":
    key = jax.random.PRNGKey(0)
    k_param, k_state = jax.random.split(key)

    batch = 8
    input_dims = 8      # e.g. an 8-dim observation vector
    n_actions = 4

    params = init_params(k_param, input_dims, n_actions)
    state = jax.random.normal(k_state, (batch, input_dims), jnp.float32)

    out = dqn_forward(state, params, n_actions)
    out = jax.block_until_ready(out)

    ref = dqn_forward_ref(state, params, n_actions)
    assert out.shape == (batch, n_actions)
    assert jnp.allclose(out, ref, atol=1e-2, rtol=1e-2), (
        jnp.max(jnp.abs(out - ref)))

    print("KERNEL_OK")
</pallas_src>

<mosaic_0001>
module attributes {stable_mosaic.version = 11 : i64} {
  func.func @dqn_mlp_kernel(%arg0: i32, %arg1: memref<8x8xf32, #tpu.memory_space<vmem>>, %arg2: memref<8x256xbf16, #tpu.memory_space<vmem>>, %arg3: memref<1x256xf32, #tpu.memory_space<vmem>>, %arg4: memref<256x256xbf16, #tpu.memory_space<vmem>>, %arg5: memref<1x256xf32, #tpu.memory_space<vmem>>, %arg6: memref<256x128xbf16, #tpu.memory_space<vmem>>, %arg7: memref<1x128xf32, #tpu.memory_space<vmem>>, %arg8: memref<8x128xf32, #tpu.memory_space<vmem>>) attributes {dimension_semantics = [#tpu.dimension_semantics<parallel>], iteration_bounds = array<i64: 1>, scalar_prefetch = 0 : i64, scratch_operands = 0 : i64, tpu.core_type = #tpu.core_type<tc>, window_params = [{transform_indices = @transform_0, window_bounds = array<i64: 8, 8>}, {pipeline_mode = #tpu.pipeline_mode<synchronous>, transform_indices = @transform_1, window_bounds = array<i64: 8, 256>}, {pipeline_mode = #tpu.pipeline_mode<synchronous>, transform_indices = @transform_2, window_bounds = array<i64: 1, 256>}, {pipeline_mode = #tpu.pipeline_mode<synchronous>, transform_indices = @transform_3, window_bounds = array<i64: 256, 256>}, {pipeline_mode = #tpu.pipeline_mode<synchronous>, transform_indices = @transform_4, window_bounds = array<i64: 1, 256>}, {pipeline_mode = #tpu.pipeline_mode<synchronous>, transform_indices = @transform_5, window_bounds = array<i64: 256, 128>}, {pipeline_mode = #tpu.pipeline_mode<synchronous>, transform_indices = @transform_6, window_bounds = array<i64: 1, 128>}, {transform_indices = @transform_7, window_bounds = array<i64: 8, 128>}]} {
    %c0 = arith.constant 0 : index
    %c0_0 = arith.constant 0 : index
    %0 = vector.load %arg1[%c0, %c0_0] : memref<8x8xf32, #tpu.memory_space<vmem>>, vector<8x8xf32>
    %1 = arith.truncf %0 : vector<8x8xf32> to vector<8x8xbf16>
    %c0_1 = arith.constant 0 : index
    %c0_2 = arith.constant 0 : index
    %2 = vector.load %arg2[%c0_1, %c0_2] : memref<8x256xbf16, #tpu.memory_space<vmem>>, vector<8x256xbf16>
    %cst = arith.constant dense<0.000000e+00> : vector<8x256xf32>
    %3 = tpu.matmul %1, %2, %cst {dimension_numbers = #tpu.dot_dimension_numbers<[1], [0], [0], [1], [0, 0, 1, 1], [], []>} : vector<8x8xbf16>, vector<8x256xbf16>, vector<8x256xf32> -> vector<8x256xf32>
    %c0_3 = arith.constant 0 : index
    %c0_4 = arith.constant 0 : index
    %4 = vector.load %arg3[%c0_3, %c0_4] : memref<1x256xf32, #tpu.memory_space<vmem>>, vector<1x256xf32>
    %5 = vector.broadcast %4 : vector<1x256xf32> to vector<8x256xf32>
    %6 = arith.addf %3, %5 : vector<8x256xf32>
    %cst_5 = arith.constant 0.000000e+00 : f32
    %7 = vector.broadcast %cst_5 : f32 to vector<8x256xf32>
    %8 = arith.maximumf %6, %7 : vector<8x256xf32>
    %9 = arith.truncf %8 : vector<8x256xf32> to vector<8x256xbf16>
    %c0_6 = arith.constant 0 : index
    %c0_7 = arith.constant 0 : index
    %10 = vector.load %arg4[%c0_6, %c0_7] : memref<256x256xbf16, #tpu.memory_space<vmem>>, vector<256x256xbf16>
    %cst_8 = arith.constant dense<0.000000e+00> : vector<8x256xf32>
    %11 = tpu.matmul %9, %10, %cst_8 {dimension_numbers = #tpu.dot_dimension_numbers<[1], [0], [0], [1], [0, 0, 1, 1], [], []>} : vector<8x256xbf16>, vector<256x256xbf16>, vector<8x256xf32> -> vector<8x256xf32>
    %c0_9 = arith.constant 0 : index
    %c0_10 = arith.constant 0 : index
    %12 = vector.load %arg5[%c0_9, %c0_10] : memref<1x256xf32, #tpu.memory_space<vmem>>, vector<1x256xf32>
    %13 = vector.broadcast %12 : vector<1x256xf32> to vector<8x256xf32>
    %14 = arith.addf %11, %13 : vector<8x256xf32>
    %cst_11 = arith.constant 0.000000e+00 : f32
    %15 = vector.broadcast %cst_11 : f32 to vector<8x256xf32>
    %16 = arith.maximumf %14, %15 : vector<8x256xf32>
    %17 = arith.truncf %16 : vector<8x256xf32> to vector<8x256xbf16>
    %c0_12 = arith.constant 0 : index
    %c0_13 = arith.constant 0 : index
    %18 = vector.load %arg6[%c0_12, %c0_13] : memref<256x128xbf16, #tpu.memory_space<vmem>>, vector<256x128xbf16>
    %cst_14 = arith.constant dense<0.000000e+00> : vector<8x128xf32>
    %19 = tpu.matmul %17, %18, %cst_14 {dimension_numbers = #tpu.dot_dimension_numbers<[1], [0], [0], [1], [0, 0, 1, 1], [], []>} : vector<8x256xbf16>, vector<256x128xbf16>, vector<8x128xf32> -> vector<8x128xf32>
    %c0_15 = arith.constant 0 : index
    %c0_16 = arith.constant 0 : index
    %20 = vector.load %arg7[%c0_15, %c0_16] : memref<1x128xf32, #tpu.memory_space<vmem>>, vector<1x128xf32>
    %21 = vector.broadcast %20 : vector<1x128xf32> to vector<8x128xf32>
    %22 = arith.addf %19, %21 : vector<8x128xf32>
    %c0_17 = arith.constant 0 : index
    %c0_18 = arith.constant 0 : index
    %23 = vector.load %arg8[%c0_17, %c0_18] : memref<8x128xf32, #tpu.memory_space<vmem>>, vector<8x128xf32>
    tpu.vector_store %arg8[%c0_17, %c0_18], %22 {strides = array<i32>} : memref<8x128xf32, #tpu.memory_space<vmem>>, vector<8x128xf32>,
    return
  }
  func.func @transform_0(%arg0: i32) -> (i32, i32) {
    %c0_i32 = arith.constant 0 : i32
    %c0_i32_0 = arith.constant 0 : i32
    return %arg0, %c0_i32 : i32, i32
  }
  func.func @transform_1(%arg0: i32) -> (i32, i32) {
    %c0_i32 = arith.constant 0 : i32
    %c0_i32_0 = arith.constant 0 : i32
    %c0_i32_1 = arith.constant 0 : i32
    return %c0_i32, %c0_i32_0 : i32, i32
  }
  func.func @transform_2(%arg0: i32) -> (i32, i32) {
    %c0_i32 = arith.constant 0 : i32
    %c0_i32_0 = arith.constant 0 : i32
    %c0_i32_1 = arith.constant 0 : i32
    return %c0_i32, %c0_i32_0 : i32, i32
  }
  func.func @transform_3(%arg0: i32) -> (i32, i32) {
    %c0_i32 = arith.constant 0 : i32
    %c0_i32_0 = arith.constant 0 : i32
    %c0_i32_1 = arith.constant 0 : i32
    return %c0_i32, %c0_i32_0 : i32, i32
  }
  func.func @transform_4(%arg0: i32) -> (i32, i32) {
    %c0_i32 = arith.constant 0 : i32
    %c0_i32_0 = arith.constant 0 : i32
    %c0_i32_1 = arith.constant 0 : i32
    return %c0_i32, %c0_i32_0 : i32, i32
  }
  func.func @transform_5(%arg0: i32) -> (i32, i32) {
    %c0_i32 = arith.constant 0 : i32
    %c0_i32_0 = arith.constant 0 : i32
    %c0_i32_1 = arith.constant 0 : i32
    return %c0_i32, %c0_i32_0 : i32, i32
  }
  func.func @transform_6(%arg0: i32) -> (i32, i32) {
    %c0_i32 = arith.constant 0 : i32
    %c0_i32_0 = arith.constant 0 : i32
    %c0_i32_1 = arith.constant 0 : i32
    return %c0_i32, %c0_i32_0 : i32, i32
  }
  func.func @transform_7(%arg0: i32) -> (i32, i32) {
    %c0_i32 = arith.constant 0 : i32
    %c0_i32_0 = arith.constant 0 : i32
    return %arg0, %c0_i32 : i32, i32
  }
}

</mosaic_0001>

<llo_original>
// kernel: dqn_forward.1
$region0: #{dqn_forward.1}
  #allocation0 [shape = 'u32[]', space=smem, size = 0x4, offset = 0x4, fixed_abs, tag = 'smem constant byte address 0x4 - core index']
  #allocation1 [shape = 'u32[144,128]{1,0:T(1,128)}', space=vmem, size = 0x12000, scoped, tag = 'internal scratch']
  %s0 = inlined_call_operand.hbm [shape: f32[8,8], index: 0, kind: input, shape index: {}]
  %s1 = inlined_call_operand.hbm [shape: bf16[8,256], index: 1, kind: input, shape index: {}]
  %s2 = inlined_call_operand.vmem [shape: f32[1,256], index: 2, kind: input, shape index: {}]
  %s3 = inlined_call_operand.hbm [shape: bf16[256,256], index: 3, kind: input, shape index: {}]
  %s4 = inlined_call_operand.vmem [shape: f32[1,256], index: 4, kind: input, shape index: {}]
  %s5 = inlined_call_operand.hbm [shape: bf16[256,128], index: 5, kind: input, shape index: {}]
  %s6 = inlined_call_operand.vmem [shape: f32[1,128], index: 6, kind: input, shape index: {}]
  %s7 = inlined_call_operand.vmem [shape: f32[8,128], index: 7, kind: output, shape index: {}]
  %s8 = sld [smem:[#allocation0]]
  $region54: #{dqn_forward.1} parent=0
    _
  %s10 = ssub.s32 1, %s8
  %s11 = scalar_select 0, %s10, %s8
  $region1: #{dqn_forward.1} parent=0
    #allocation2 [shape = 'u8[4096]{0}', space=vmem, size = 0x1000, scoped, tag = 'input window, operand 0, single buffered']
    #allocation3 [shape = 's32[1]{0}', space=sflag, size = 0x4, scoped, tag = 'scoped memory for dqn_forward.1']
    #allocation4 [shape = 'u8[4096]{0}', space=vmem, size = 0x1000, scoped, tag = 'input window, operand 1, single buffered']
    #allocation5 [shape = 's32[1]{0}', space=sflag, size = 0x4, scoped, tag = 'scoped memory for dqn_forward.1']
    #allocation6 [shape = 'u8[131072]{0}', space=vmem, size = 0x20000, scoped, tag = 'input window, operand 3, single buffered']
    #allocation7 [shape = 'u8[65536]{0}', space=vmem, size = 0x10000, scoped, tag = 'input window, operand 5, single buffered']
    #allocation8 [shape = 's32[1]{0}', space=sflag, size = 0x4, scoped, tag = 'scoped memory for dqn_forward.1']
    %12 = vsyncpa [#allocation3], 0
    %13 = vsyncpa [#allocation5], 0
    %14 = vsyncpa [#allocation8], 0
    // Predicated region
    $region2: #{dqn_forward.1} parent=1 // pred_check
      _
    $region3: #{dqn_forward.1} parent=1 // pred_check_branch
      %16 = sbr.rel (0) target = $region5
    $region4: #{dqn_forward.1} parent=1 // pred_region
      %s18 = ssub.s32 128, 128
      %19 = vsyncadd [#allocation3], %s18
      %s21 = sshll.u32 [#allocation2], 4
      %s22 = int_to_ptr.vmem [resolvable:$true] %s21
      %24 = dma.hbm_to_vmem [thread:$0]  %s0, 128, %s22, [#allocation3]
    $region5: #{dqn_forward.1} parent=1 // pred_fallthru
      _
    // Predicated region
    $region6: #{dqn_forward.1} parent=1 // pred_check
      _
    $region7: #{dqn_forward.1} parent=1 // pred_check_branch
      %26 = sbr.rel (0) target = $region9
    $region8: #{dqn_forward.1} parent=1 // pred_region
      %s28 = ssub.s32 128, 128
      %29 = vsyncadd [#allocation5], %s28
      %s31 = sshll.u32 [#allocation4], 4
      %s32 = int_to_ptr.vmem [resolvable:$true] %s31
      %34 = dma.hbm_to_vmem [thread:$0]  %s1, 128, %s32, [#allocation5]
    $region9: #{dqn_forward.1} parent=1 // pred_fallthru
      _
    // Predicated region
    $region10: #{dqn_forward.1} parent=1 // pred_check
      _
    $region11: #{dqn_forward.1} parent=1 // pred_check_branch
      %36 = sbr.rel (0) target = $region13
    $region12: #{dqn_forward.1} parent=1 // pred_region
      _
    $region13: #{dqn_forward.1} parent=1 // pred_fallthru
      _
    // Predicated region
    $region14: #{dqn_forward.1} parent=1 // pred_check
      _
    $region15: #{dqn_forward.1} parent=1 // pred_check_branch
      %38 = sbr.rel (0) target = $region17
    $region16: #{dqn_forward.1} parent=1 // pred_region
      %s40 = ssub.s32 4096, 4096
      %41 = vsyncadd [#allocation5], %s40
      %s42 = sshll.u32 [#allocation6], 4
      %s43 = int_to_ptr.vmem [resolvable:$true] %s42
      %48 = dma.hbm_to_vmem [thread:$0]  %s3, 4096, %s43, [#allocation5], 128, 128, 8
    $region17: #{dqn_forward.1} parent=1 // pred_fallthru
      _
    // Predicated region
    $region18: #{dqn_forward.1} parent=1 // pred_check
      _
    $region19: #{dqn_forward.1} parent=1 // pred_check_branch
      %50 = sbr.rel (0) target = $region21
    $region20: #{dqn_forward.1} parent=1 // pred_region
      _
    $region21: #{dqn_forward.1} parent=1 // pred_fallthru
      _
    // Predicated region
    $region22: #{dqn_forward.1} parent=1 // pred_check
      _
    $region23: #{dqn_forward.1} parent=1 // pred_check_branch
      %52 = sbr.rel (0) target = $region25
    $region24: #{dqn_forward.1} parent=1 // pred_region
      %s54 = ssub.s32 2048, 2048
      %55 = vsyncadd [#allocation8], %s54
      %s56 = sshll.u32 [#allocation7], 4
      %s57 = int_to_ptr.vmem [resolvable:$true] %s56
      %62 = dma.hbm_to_vmem [thread:$0]  %s5, 2048, %s57, [#allocation8], 64, 64, 4
    $region25: #{dqn_forward.1} parent=1 // pred_fallthru
      _
    // Predicated region
    $region26: #{dqn_forward.1} parent=1 // pred_check
      _
    $region27: #{dqn_forward.1} parent=1 // pred_check_branch
      %64 = sbr.rel (0) target = $region29
    $region28: #{dqn_forward.1} parent=1 // pred_region
      _
    $region29: #{dqn_forward.1} parent=1 // pred_fallthru
      _
    // Predicated region
    $region30: #{dqn_forward.1} parent=1 // pred_check
      _
    $region31: #{dqn_forward.1} parent=1 // pred_check_branch
      %66 = sbr.rel (0) target = $region33
    $region32: #{dqn_forward.1} parent=1 // pred_region
      %67 = dma.done [#allocation3], 128
    $region33: #{dqn_forward.1} parent=1 // pred_fallthru
      _
    // Predicated region
    $region34: #{dqn_forward.1} parent=1 // pred_check
      _
    $region35: #{dqn_forward.1} parent=1 // pred_check_branch
      %69 = sbr.rel (0) target = $region37
    $region36: #{dqn_forward.1} parent=1 // pred_region
      %70 = dma.done [#allocation5], 128
    $region37: #{dqn_forward.1} parent=1 // pred_fallthru
      _
    // Predicated region
    $region38: #{dqn_forward.1} parent=1 // pred_check
      _
    $region39: #{dqn_forward.1} parent=1 // pred_check_branch
      %72 = sbr.rel (0) target = $region41
    $region40: #{dqn_forward.1} parent=1 // pred_region
      %73 = dma.done [#allocation5], 4096
    $region41: #{dqn_forward.1} parent=1 // pred_fallthru
      _
    // Predicated region
    $region42: #{dqn_forward.1} parent=1 // pred_check
      _
    $region43: #{dqn_forward.1} parent=1 // pred_check_branch
      %75 = sbr.rel (0) target = $region45
    $region44: #{dqn_forward.1} parent=1 // pred_region
      %76 = dma.done [#allocation8], 2048
    $region45: #{dqn_forward.1} parent=1 // pred_fallthru
      _
    %v78 = vld [vmem:[#allocation2] sm:$0xff]
    %v79 = vpack.c.bf16 %v78, %v78
    %v80 = vld [vmem:[#allocation4] sm:$0xff]
    %v81 = vld [vmem:[%s2] sm:$0x3]
    %v83 = vlaneseq
    %v84 = vshrl.u32 %v83, 7
    %v85 = vsub.s32 0, %v84
    %v86 = vrot.slane %v81, %v85
    %v87 = vlaneseq
    %v88 = vshrl.u32 %v87, 7
    %v89 = vsub.s32 1, %v88
    %v90 = vrot.slane %v81, %v89
    %v94 = vunpack.c.l.b16 %v80
    %v95 = vunpack.c.h.b16 %v80
    %v96 = vpack.c.b16 %v94, %v94
    %v97 = vpack.c.b16 %v95, %v95
    %vm98 = vcmask 64512
    %v100 = vsel %vm98, %v79, 0
    %vm102 = vcmask 1043456
    %v104 = vsel %vm102, %v96, 0
    %v107 = vsel %vm102, %v97, 0
    %109 = vmatprep.subr.bf16.mxu0 %v107
    %110 = vmatpush1.bf16.msra.mxu0 %v104
    %111 = vmatprep.subr.bf16.mxu0 0
    %112 = vmatpush1.bf16.msra.mxu0 0
    %113 = vmatprep.subr.bf16.mxu0 0
    %114 = vmatpush1.bf16.msra.mxu0 0
    %115 = vmatprep.subr.bf16.mxu0 0
    %116 = vmatpush1.bf16.msra.mxu0 0
    %117 = vmatprep.subr.bf16.mxu0 0
    %118 = vmatpush1.bf16.msra.mxu0 0
    %119 = vmatprep.subr.bf16.mxu0 0
    %120 = vmatpush1.bf16.msra.mxu0 0
    %121 = vmatprep.subr.bf16.mxu0 0
    %122 = vmatpush1.bf16.msra.mxu0 0
    %123 = vmatprep.subr.bf16.mxu0 0
    %124 = vmatpush1.bf16.msra.mxu0 0
    %125 = vmatprep.subr.bf16.mxu0 0
    %126 = vmatpush1.bf16.msra.mxu0 0
    %127 = vmatprep.subr.bf16.mxu0 0
    %128 = vmatpush1.bf16.msra.mxu0 0
    %129 = vmatprep.subr.bf16.mxu0 0
    %130 = vmatpush1.bf16.msra.mxu0 0
    %131 = vmatprep.subr.bf16.mxu0 0
    %132 = vmatpush1.bf16.msra.mxu0 0
    %133 = vmatprep.subr.bf16.mxu0 0
    %134 = vmatpush1.bf16.msra.mxu0 0
    %135 = vmatprep.subr.bf16.mxu0 0
    %136 = vmatpush1.bf16.msra.mxu0 0
    %137 = vmatprep.subr.bf16.mxu0 0
    %138 = vmatpush1.bf16.msra.mxu0 0
    %139 = vmatprep.subr.bf16.mxu0 0
    %140 = vmatpush1.bf16.msra.mxu0 0
    %141 = vmatprep.mubr.bf16.mxu0 0
    %142 = vmatmul.mubr.bf16.gmra.mrb[0].mxu0 %v100
    %v143 = vpop.f32.mrb[0].mxu0
    %v144 = vadd.f32 %v86, %v143
    %v145 = vpop.f32.mrb[0].mxu0
    %v146 = vadd.f32 %v90, %v145
    %v147 = vpop.f32.mrb[0].mxu0
    %v148 = vpop.f32.mrb[0].mxu0
    %149 = vdwg.mxu0
    %v150 = vmax.f32 %v144, 0.0
    %v151 = vmax.f32 %v146, 0.0
    %v152 = vpack.c.bf16 %v150, %v150
    %v153 = vpack.c.bf16 %v151, %v151
    %v154 = vld [vmem:[#allocation6] sm:$0xff]
    %v155 = vld [vmem:[#allocation6 + $0x8] sm:$0xff]
    %v156 = vld [vmem:[#allocation6 + $0x10] sm:$0xff]
    %v157 = vld [vmem:[#allocation6 + $0x18] sm:$0xff]
    %v158 = vld [vmem:[#allocation6 + $0x20] sm:$0xff]
    %v159 = vld [vmem:[#allocation6 + $0x28] sm:$0xff]
    %v160 = vld [vmem:[#allocation6 + $0x30] sm:$0xff]
    %v161 = vld [vmem:[#allocation6 + $0x38] sm:$0xff]
    %v162 = vld [vmem:[#allocation6 + $0x40] sm:$0xff]
    %v163 = vld [vmem:[#allocation6 + $0x48] sm:$0xff]
    %v164 = vld [vmem:[#allocation6 + $0x50] sm:$0xff]
    %v165 = vld [vmem:[#allocation6 + $0x58] sm:$0xff]
    %v166 = vld [vmem:[#allocation6 + $0x60] sm:$0xff]
    %v167 = vld [vmem:[#allocation6 + $0x68] sm:$0xff]
    %v168 = vld [vmem:[#allocation6 + $0x70] sm:$0xff]
    %v169 = vld [vmem:[#allocation6 + $0x78] sm:$0xff]
    %v170 = vld [vmem:[#allocation6 + $0x80] sm:$0xff]
    %v171 = vld [vmem:[#allocation6 + $0x88] sm:$0xff]
    %v172 = vld [vmem:[#allocation6 + $0x90] sm:$0xff]
    %v173 = vld [vmem:[#allocation6 + $0x98] sm:$0xff]
    %v174 = vld [vmem:[#allocation6 + $0xa0] sm:$0xff]
    %v175 = vld [vmem:[#allocation6 + $0xa8] sm:$0xff]
    %v176 = vld [vmem:[#allocation6 + $0xb0] sm:$0xff]
    %v177 = vld [vmem:[#allocation6 + $0xb8] sm:$0xff]
    %v178 = vld [vmem:[#allocation6 + $0xc0] sm:$0xff]
    %v179 = vld [vmem:[#allocation6 + $0xc8] sm:$0xff]
    %v180 = vld [vmem:[#allocation6 + $0xd0] sm:$0xff]
    %v181 = vld [vmem:[#allocation6 + $0xd8] sm:$0xff]
    %v182 = vld [vmem:[#allocation6 + $0xe0] sm:$0xff]
    %v183 = vld [vmem:[#allocation6 + $0xe8] sm:$0xff]
    %v184 = vld [vmem:[#allocation6 + $0xf0] sm:$0xff]
    %v185 = vld [vmem:[#allocation6 + $0xf8] sm:$0xff]
    %v186 = vld [vmem:[%s4] sm:$0x3]
    %v188 = vlaneseq
    %v189 = vshrl.u32 %v188, 7
    %v190 = vsub.s32 0, %v189
    %v191 = vrot.slane %v186, %v190
    %v192 = vlaneseq
    %v193 = vshrl.u32 %v192, 7
    %v194 = vsub.s32 1, %v193
    %v195 = vrot.slane %v186, %v194
    %v230 = vunpack.c.l.b16 %v154
    %v231 = vunpack.c.h.b16 %v154
    %v232 = vunpack.c.l.b16 %v155
    %v233 = vunpack.c.h.b16 %v155
    %v234 = vunpack.c.l.b16 %v156
    %v235 = vunpack.c.h.b16 %v156
    %v236 = vunpack.c.l.b16 %v157
    %v237 = vunpack.c.h.b16 %v157
    %v238 = vunpack.c.l.b16 %v158
    %v239 = vunpack.c.h.b16 %v158
    %v240 = vunpack.c.l.b16 %v159
    %v241 = vunpack.c.h.b16 %v159
    %v242 = vunpack.c.l.b16 %v160
    %v243 = vunpack.c.h.b16 %v160
    %v244 = vunpack.c.l.b16 %v161
    %v245 = vunpack.c.h.b16 %v161
    %v246 = vunpack.c.l.b16 %v162
    %v247 = vunpack.c.h.b16 %v162
    %v248 = vunpack.c.l.b16 %v163
    %v249 = vunpack.c.h.b16 %v163
    %v250 = vunpack.c.l.b16 %v164
    %v251 = vunpack.c.h.b16 %v164
    %v252 = vunpack.c.l.b16 %v165
    %v253 = vunpack.c.h.b16 %v165
    %v254 = vunpack.c.l.b16 %v166
    %v255 = vunpack.c.h.b16 %v166
    %v256 = vunpack.c.l.b16 %v167
    %v257 = vunpack.c.h.b16 %v167
    %v258 = vunpack.c.l.b16 %v168
    %v259 = vunpack.c.h.b16 %v168
    %v260 = vunpack.c.l.b16 %v169
    %v261 = vunpack.c.h.b16 %v169
    %v262 = vunpack.c.l.b16 %v170
    %v263 = vunpack.c.h.b16 %v170
    %v264 = vunpack.c.l.b16 %v171
    %v265 = vunpack.c.h.b16 %v171
    %v266 = vunpack.c.l.b16 %v172
    %v267 = vunpack.c.h.b16 %v172
    %v268 = vunpack.c.l.b16 %v173
    %v269 = vunpack.c.h.b16 %v173
    %v270 = vunpack.c.l.b16 %v174
    %v271 = vunpack.c.h.b16 %v174
    %v272 = vunpack.c.l.b16 %v175
    %v273 = vunpack.c.h.b16 %v175
    %v274 = vunpack.c.l.b16 %v176
    %v275 = vunpack.c.h.b16 %v176
    %v276 = vunpack.c.l.b16 %v177
    %v277 = vunpack.c.h.b16 %v177
    %v278 = vunpack.c.l.b16 %v178
    %v279 = vunpack.c.h.b16 %v178
    %v280 = vunpack.c.l.b16 %v179
    %v281 = vunpack.c.h.b16 %v179
    %v282 = vunpack.c.l.b16 %v180
    %v283 = vunpack.c.h.b16 %v180
    %v284 = vunpack.c.l.b16 %v181
    %v285 = vunpack.c.h.b16 %v181
    %v286 = vunpack.c.l.b16 %v182
    %v287 = vunpack.c.h.b16 %v182
    %v288 = vunpack.c.l.b16 %v183
    %v289 = vunpack.c.h.b16 %v183
    %v290 = vunpack.c.l.b16 %v184
    %v291 = vunpack.c.h.b16 %v184
    %v292 = vunpack.c.l.b16 %v185
    %v293 = vunpack.c.h.b16 %v185
    %v294 = vpack.c.b16 %v232, %v230
    %v295 = vpack.c.b16 %v233, %v231
    %v296 = vpack.c.b16 %v236, %v234
    %v297 = vpack.c.b16 %v237, %v235
    %v298 = vpack.c.b16 %v240, %v238
    %v299 = vpack.c.b16 %v241, %v239
    %v300 = vpack.c.b16 %v244, %v242
    %v301 = vpack.c.b16 %v245, %v243
    %v302 = vpack.c.b16 %v248, %v246
    %v303 = vpack.c.b16 %v249, %v247
    %v304 = vpack.c.b16 %v252, %v250
    %v305 = vpack.c.b16 %v253, %v251
    %v306 = vpack.c.b16 %v256, %v254
    %v307 = vpack.c.b16 %v257, %v255
    %v308 = vpack.c.b16 %v260, %v258
    %v309 = vpack.c.b16 %v261, %v259
    %v310 = vpack.c.b16 %v264, %v262
    %v311 = vpack.c.b16 %v265, %v263
    %v312 = vpack.c.b16 %v268, %v266
    %v313 = vpack.c.b16 %v269, %v267
    %v314 = vpack.c.b16 %v272, %v270
    %v315 = vpack.c.b16 %v273, %v271
    %v316 = vpack.c.b16 %v276, %v274
    %v317 = vpack.c.b16 %v277, %v275
    %v318 = vpack.c.b16 %v280, %v278
    %v319 = vpack.c.b16 %v281, %v279
    %v320 = vpack.c.b16 %v284, %v282
    %v321 = vpack.c.b16 %v285, %v283
    %v322 = vpack.c.b16 %v288, %v286
    %v323 = vpack.c.b16 %v289, %v287
    %v324 = vpack.c.b16 %v292, %v290
    %v325 = vpack.c.b16 %v293, %v291
    %358 = vmatprep.subr.bf16.mxu0 %v295
    %359 = vmatpush1.bf16.msra.mxu0 %v294
    %360 = vmatprep.subr.bf16.mxu0 %v297
    %361 = vmatpush1.bf16.msra.mxu0 %v296
    %362 = vmatprep.subr.bf16.mxu0 %v299
    %363 = vmatpush1.bf16.msra.mxu0 %v298
    %364 = vmatprep.subr.bf16.mxu0 %v301
    %365 = vmatpush1.bf16.msra.mxu0 %v300
    %366 = vmatprep.subr.bf16.mxu0 %v303
    %367 = vmatpush1.bf16.msra.mxu0 %v302
    %368 = vmatprep.subr.bf16.mxu0 %v305
    %369 = vmatpush1.bf16.msra.mxu0 %v304
    %370 = vmatprep.subr.bf16.mxu0 %v307
    %371 = vmatpush1.bf16.msra.mxu0 %v306
    %372 = vmatprep.subr.bf16.mxu0 %v309
    %373 = vmatpush1.bf16.msra.mxu0 %v308
    %374 = vmatprep.subr.bf16.mxu0 %v311
    %375 = vmatpush1.bf16.msra.mxu0 %v310
    %376 = vmatprep.subr.bf16.mxu0 %v313
    %377 = vmatpush1.bf16.msra.mxu0 %v312
    %378 = vmatprep.subr.bf16.mxu0 %v315
    %379 = vmatpush1.bf16.msra.mxu0 %v314
    %380 = vmatprep.subr.bf16.mxu0 %v317
    %381 = vmatpush1.bf16.msra.mxu0 %v316
    %382 = vmatprep.subr.bf16.mxu0 %v319
    %383 = vmatpush1.bf16.msra.mxu0 %v318
    %384 = vmatprep.subr.bf16.mxu0 %v321
    %385 = vmatpush1.bf16.msra.mxu0 %v320
    %386 = vmatprep.subr.bf16.mxu0 %v323
    %387 = vmatpush1.bf16.msra.mxu0 %v322
    %388 = vmatprep.subr.bf16.mxu0 %v325
    %389 = vmatpush1.bf16.msra.mxu0 %v324
    %390 = vmatprep.mubr.bf16.mxu0 %v153
    %391 = vmatmul.mubr.bf16.gmra.mrb[0].mxu0 %v152
    %v392 = vpop.f32.mrb[0].mxu0
    %v393 = vadd.f32 %v191, %v392
    %v394 = vpop.f32.mrb[0].mxu0
    %v395 = vadd.f32 %v195, %v394
    %v396 = vpop.f32.mrb[0].mxu0
    %v397 = vpop.f32.mrb[0].mxu0
    %398 = vdwg.mxu0
    %v399 = vmax.f32 %v393, 0.0
    %v400 = vmax.f32 %v395, 0.0
    %v401 = vpack.c.bf16 %v399, %v399
    %v402 = vpack.c.bf16 %v400, %v400
    %v403 = vld [vmem:[#allocation7] sm:$0xf]
    %v404 = vld [vmem:[#allocation7 + $0x4] sm:$0xf]
    %v405 = vld [vmem:[#allocation7 + $0x8] sm:$0xf]
    %v406 = vld [vmem:[#allocation7 + $0xc] sm:$0xf]
    %v407 = vld [vmem:[#allocation7 + $0x10] sm:$0xf]
    %v408 = vld [vmem:[#allocation7 + $0x14] sm:$0xf]
    %v409 = vld [vmem:[#allocation7 + $0x18] sm:$0xf]
    %v410 = vld [vmem:[#allocation7 + $0x1c] sm:$0xf]
    %v411 = vld [vmem:[#allocation7 + $0x20] sm:$0xf]
    %v412 = vld [vmem:[#allocation7 + $0x24] sm:$0xf]
    %v413 = vld [vmem:[#allocation7 + $0x28] sm:$0xf]
    %v414 = vld [vmem:[#allocation7 + $0x2c] sm:$0xf]
    %v415 = vld [vmem:[#allocation7 + $0x30] sm:$0xf]
    %v416 = vld [vmem:[#allocation7 + $0x34] sm:$0xf]
    %v417 = vld [vmem:[#allocation7 + $0x38] sm:$0xf]
    %v418 = vld [vmem:[#allocation7 + $0x3c] sm:$0xf]
    %v419 = vld [vmem:[#allocation7 + $0x40] sm:$0xf]
    %v420 = vld [vmem:[#allocation7 + $0x44] sm:$0xf]
    %v421 = vld [vmem:[#allocation7 + $0x48] sm:$0xf]
    %v422 = vld [vmem:[#allocation7 + $0x4c] sm:$0xf]
    %v423 = vld [vmem:[#allocation7 + $0x50] sm:$0xf]
    %v424 = vld [vmem:[#allocation7 + $0x54] sm:$0xf]
    %v425 = vld [vmem:[#allocation7 + $0x58] sm:$0xf]
    %v426 = vld [vmem:[#allocation7 + $0x5c] sm:$0xf]
    %v427 = vld [vmem:[#allocation7 + $0x60] sm:$0xf]
    %v428 = vld [vmem:[#allocation7 + $0x64] sm:$0xf]
    %v429 = vld [vmem:[#allocation7 + $0x68] sm:$0xf]
    %v430 = vld [vmem:[#allocation7 + $0x6c] sm:$0xf]
    %v431 = vld [vmem:[#allocation7 + $0x70] sm:$0xf]
    %v432 = vld [vmem:[#allocation7 + $0x74] sm:$0xf]
    %v433 = vld [vmem:[#allocation7 + $0x78] sm:$0xf]
    %v434 = vld [vmem:[#allocation7 + $0x7c] sm:$0xf]
    %v435 = vld [vmem:[%s6] sm:$0x1]
    %v437 = vlaneseq
    %v438 = vshrl.u32 %v437, 7
    %v439 = vsub.s32 0, %v438
    %v440 = vrot.slane %v435, %v439
    %v474 = vunpack.c.l.b16 %v403
    %v475 = vunpack.c.l.b16 %v404
    %v476 = vunpack.c.l.b16 %v405
    %v477 = vunpack.c.l.b16 %v406
    %v478 = vunpack.c.l.b16 %v407
    %v479 = vunpack.c.l.b16 %v408
    %v480 = vunpack.c.l.b16 %v409
    %v481 = vunpack.c.l.b16 %v410
    %v482 = vunpack.c.l.b16 %v411
    %v483 = vunpack.c.l.b16 %v412
    %v484 = vunpack.c.l.b16 %v413
    %v485 = vunpack.c.l.b16 %v414
    %v486 = vunpack.c.l.b16 %v415
    %v487 = vunpack.c.l.b16 %v416
    %v488 = vunpack.c.l.b16 %v417
    %v489 = vunpack.c.l.b16 %v418
    %v490 = vunpack.c.l.b16 %v419
    %v491 = vunpack.c.l.b16 %v420
    %v492 = vunpack.c.l.b16 %v421
    %v493 = vunpack.c.l.b16 %v422
    %v494 = vunpack.c.l.b16 %v423
    %v495 = vunpack.c.l.b16 %v424
    %v496 = vunpack.c.l.b16 %v425
    %v497 = vunpack.c.l.b16 %v426
    %v498 = vunpack.c.l.b16 %v427
    %v499 = vunpack.c.l.b16 %v428
    %v500 = vunpack.c.l.b16 %v429
    %v501 = vunpack.c.l.b16 %v430
    %v502 = vunpack.c.l.b16 %v431
    %v503 = vunpack.c.l.b16 %v432
    %v504 = vunpack.c.l.b16 %v433
    %v505 = vunpack.c.l.b16 %v434
    %v506 = vpack.c.b16 %v475, %v474
    %v507 = vpack.c.b16 %v477, %v476
    %v508 = vpack.c.b16 %v479, %v478
    %v509 = vpack.c.b16 %v481, %v480
    %v510 = vpack.c.b16 %v483, %v482
    %v511 = vpack.c.b16 %v485, %v484
    %v512 = vpack.c.b16 %v487, %v486
    %v513 = vpack.c.b16 %v489, %v488
    %v514 = vpack.c.b16 %v491, %v490
    %v515 = vpack.c.b16 %v493, %v492
    %v516 = vpack.c.b16 %v495, %v494
    %v517 = vpack.c.b16 %v497, %v496
    %v518 = vpack.c.b16 %v499, %v498
    %v519 = vpack.c.b16 %v501, %v500
    %v520 = vpack.c.b16 %v503, %v502
    %v521 = vpack.c.b16 %v505, %v504
    %538 = vmatprep.subr.bf16.mxu0 0
    %539 = vmatpush1.bf16.msra.mxu0 %v506
    %540 = vmatprep.subr.bf16.mxu0 0
    %541 = vmatpush1.bf16.msra.mxu0 %v507
    %542 = vmatprep.subr.bf16.mxu0 0
    %543 = vmatpush1.bf16.msra.mxu0 %v508
    %544 = vmatprep.subr.bf16.mxu0 0
    %545 = vmatpush1.bf16.msra.mxu0 %v509
    %546 = vmatprep.subr.bf16.mxu0 0
    %547 = vmatpush1.bf16.msra.mxu0 %v510
    %548 = vmatprep.subr.bf16.mxu0 0
    %549 = vmatpush1.bf16.msra.mxu0 %v511
    %550 = vmatprep.subr.bf16.mxu0 0
    %551 = vmatpush1.bf16.msra.mxu0 %v512
    %552 = vmatprep.subr.bf16.mxu0 0
    %553 = vmatpush1.bf16.msra.mxu0 %v513
    %554 = vmatprep.subr.bf16.mxu0 0
    %555 = vmatpush1.bf16.msra.mxu0 %v514
    %556 = vmatprep.subr.bf16.mxu0 0
    %557 = vmatpush1.bf16.msra.mxu0 %v515
    %558 = vmatprep.subr.bf16.mxu0 0
    %559 = vmatpush1.bf16.msra.mxu0 %v516
    %560 = vmatprep.subr.bf16.mxu0 0
    %561 = vmatpush1.bf16.msra.mxu0 %v517
    %562 = vmatprep.subr.bf16.mxu0 0
    %563 = vmatpush1.bf16.msra.mxu0 %v518
    %564 = vmatprep.subr.bf16.mxu0 0
    %565 = vmatpush1.bf16.msra.mxu0 %v519
    %566 = vmatprep.subr.bf16.mxu0 0
    %567 = vmatpush1.bf16.msra.mxu0 %v520
    %568 = vmatprep.subr.bf16.mxu0 0
    %569 = vmatpush1.bf16.msra.mxu0 %v521
    %570 = vmatprep.mubr.bf16.mxu0 %v402
    %571 = vmatmul.mubr.bf16.gmra.mrb[0].mxu0 %v401
    %v572 = vpop.f32.mrb[0].mxu0
    %v573 = vadd.f32 %v440, %v572
    %v574 = vpop.f32.mrb[0].mxu0
    %v575 = vpop.f32.mrb[0].mxu0
    %v576 = vpop.f32.mrb[0].mxu0
    %577 = vdwg.mxu0
    %578 = vst [vmem:[%s7] sm:$0xff] %v573
    // Predicated region
    $region46: #{dqn_forward.1} parent=1 // pred_check
      _
    $region47: #{dqn_forward.1} parent=1 // pred_check_branch
      %580 = sbr.rel (0) target = $region49
    $region48: #{dqn_forward.1} parent=1 // pred_region
      _
    $region49: #{dqn_forward.1} parent=1 // pred_fallthru
      _
    // Predicated region
    $region50: #{dqn_forward.1} parent=1 // pred_check
      _
    $region51: #{dqn_forward.1} parent=1 // pred_check_branch
      %582 = sbr.rel (0) target = $region53
    $region52: #{dqn_forward.1} parent=1 // pred_region
      _
    $region53: #{dqn_forward.1} parent=1 // pred_fallthru
      _
    %583 = vsyncpa [#allocation3], 1
    %584 = vsyncpa [#allocation5], 1
    %585 = vsyncpa [#allocation8], 1

</llo_original>
